<compile_context>
chip_gen: v7x
topology: tpu7x:2x2x1
jax: 0.10.0
libtpu: 0.0.40
codegen_flags: <defaults>
</compile_context>

<pallas_src>
import math

import jax
import jax.numpy as jnp
from jax.experimental import pallas as pl
from jax.experimental.pallas import tpu as pltpu

LANE = 128   # TPU lane width; slab segments are padded to lane-aligned offsets

# Problem sizes (small, consistent with the module's intended use).
N = 256   # number of query image features (gridded axis)
C = 8     # number of classes / semantic nodes
D = 64    # image feature dim
S = 32    # raw semantic attribute dim
H = 32    # hidden semantic dim produced by the GCN semantic module
TN = 128  # N-tile size


def _make_kernel(c, s, h, d):
    inv_sqrt_d = 1.0 / math.sqrt(d)

    def kernel(cls_ref, par_ref, feats_ref, out_ref):
        f32 = jnp.float32

        # ---- unpack class-level slab (lane-aligned static slices) ----
        adj = cls_ref[:, 0:c]                          # [C, C]
        sem = cls_ref[:, LANE:LANE + s]                # [C, S]
        proto = cls_ref[:, 2 * LANE:2 * LANE + d]      # [C, D]

        # ---- unpack parameter slab ----
        w_sem = par_ref[0:s, 0:h]                      # [S, H]
        b_sem = par_ref[s:s + 1, 0:h]                  # [1, H]
        w_gb = par_ref[0:h, LANE:LANE + 2 * d]         # [H, 2D] = [W_g | W_b]
        b_gb = par_ref[s:s + 1, LANE:LANE + 2 * d]     # [1, 2D] = [b_g | b_b]

        # ---- semantic_module: one GCN layer (require_adj == True) ----
        sem_proj = jnp.dot(sem, w_sem, preferred_element_type=f32) + b_sem
        sem2 = jnp.maximum(
            jnp.dot(adj, sem_proj, preferred_element_type=f32), 0.0)   # [C, H]

        # ---- relation_module: fused FiLM (single [H, 2D] matmul) ----
        gb = jnp.dot(sem2, w_gb, preferred_element_type=f32) + b_gb    # [C, 2D]
        gamma = gb[:, :d]
        beta = gb[:, d:2 * d]
        mod_proto = gamma * proto + beta                               # [C, D]

        # scores[n, c] = <feats[n], mod_proto[c]> / sqrt(D)
        # (RHS contraction on dim 1 => implicit XLU transpose; negligible at C=8)
        scores = jax.lax.dot_general(
            feats_ref[...], mod_proto,
            dimension_numbers=(((1,), (1,)), ((), ())),
            preferred_element_type=f32) * inv_sqrt_d

        out_ref[...] = jax.nn.sigmoid(scores)

    return kernel


def combine_net_v2(image_feats, img_proto, semantics, adj, params):
    """Runs the fused CombineNetV2 forward pass as one Pallas call, gridded over N."""
    w_sem, b_sem, w_g, b_g, w_b, b_b = params
    n, d = image_feats.shape
    c = img_proto.shape[0]
    s, h = w_sem.shape

    # ---- pack class-level tensors into one lane-aligned slab (1 DMA vs 3) ----
    cls_slab = jnp.zeros((c, 3 * LANE), jnp.float32)
    cls_slab = cls_slab.at[:, 0:c].set(adj)
    cls_slab = cls_slab.at[:, LANE:LANE + s].set(semantics)
    cls_slab = cls_slab.at[:, 2 * LANE:2 * LANE + d].set(img_proto)

    # ---- pack all weights/biases into one slab; fuse FiLM weights ----
    w_gb = jnp.concatenate([w_g, w_b], axis=1)    # [H, 2D]
    b_gb = jnp.concatenate([b_g, b_b], axis=1)    # [1, 2D]
    r_pad = ((s + 1 + 7) // 8) * 8                # sublane-pad the row count
    par_slab = jnp.zeros((r_pad, LANE + 2 * d), jnp.float32)
    par_slab = par_slab.at[0:s, 0:h].set(w_sem)
    par_slab = par_slab.at[s:s + 1, 0:h].set(b_sem)
    par_slab = par_slab.at[0:h, LANE:LANE + 2 * d].set(w_gb)
    par_slab = par_slab.at[s:s + 1, LANE:LANE + 2 * d].set(b_gb)

    tn = TN if n % TN == 0 else n                 # fall back to one block if N is tiny
    grid = (n // tn,)

    kernel = _make_kernel(c, s, h, d)
    return pl.pallas_call(
        kernel,
        out_shape=jax.ShapeDtypeStruct((n, c), jnp.float32),
        grid_spec=pltpu.PrefetchScalarGridSpec(
            num_scalar_prefetch=0,
            grid=grid,
            in_specs=[
                # class-level slab: same block every step (stays resident)
                pl.BlockSpec((c, 3 * LANE), lambda i: (0, 0)),
                # parameter slab: same block every step
                pl.BlockSpec((r_pad, LANE + 2 * d), lambda i: (0, 0)),
                # image features: tiled over N, pipelined
                pl.BlockSpec((tn, d), lambda i: (i, 0)),
            ],
            out_specs=pl.BlockSpec((tn, c), lambda i: (i, 0)),
        ),
        compiler_params=pltpu.CompilerParams(
            dimension_semantics=("parallel",)),
    )(cls_slab, par_slab, image_feats)


def _reference(image_feats, img_proto, semantics, adj, params):
    """Pure-JAX reference for correctness checking."""
    w_sem, b_sem, w_g, b_g, w_b, b_b = params
    sem2 = jax.nn.relu(adj @ (semantics @ w_sem + b_sem))
    gamma = sem2 @ w_g + b_g
    beta = sem2 @ w_b + b_b
    mod_proto = gamma * img_proto + beta
    scores = image_feats @ mod_proto.T / math.sqrt(image_feats.shape[1])
    return jax.nn.sigmoid(scores)


if __name__ == "__main__":
    key = jax.random.PRNGKey(0)
    keys = jax.random.split(key, 10)

    # Inputs.
    image_feats = jax.random.normal(keys[0], (N, D), jnp.float32)
    img_proto = jax.random.normal(keys[1], (C, D), jnp.float32)
    semantics = jax.random.normal(keys[2], (C, S), jnp.float32)
    # Row-normalized adjacency with self loops (typical GCN preprocessing).
    raw_adj = jnp.abs(jax.random.normal(keys[3], (C, C), jnp.float32)) + jnp.eye(C)
    adj = raw_adj / jnp.sum(raw_adj, axis=1, keepdims=True)

    # Deterministic parameter init (fan-in scaled).
    w_sem = jax.random.normal(keys[4], (S, H), jnp.float32) / math.sqrt(S)
    b_sem = jnp.zeros((1, H), jnp.float32)
    w_g = jax.random.normal(keys[5], (H, D), jnp.float32) / math.sqrt(H)
    b_g = jnp.ones((1, D), jnp.float32)      # gamma bias -> identity-ish modulation
    w_b = jax.random.normal(keys[6], (H, D), jnp.float32) / math.sqrt(H)
    b_b = jnp.zeros((1, D), jnp.float32)
    params = (w_sem, b_sem, w_g, b_g, w_b, b_b)

    out = combine_net_v2(image_feats, img_proto, semantics, adj, params)
    out = jax.block_until_ready(out)

    ref = _reference(image_feats, img_proto, semantics, adj, params)
    assert out.shape == (N, C)
    assert jnp.allclose(out, ref, atol=1e-5, rtol=1e-5), "mismatch vs reference"

    print("KERNEL_OK")
</pallas_src>

<mosaic_0001>
module attributes {stable_mosaic.version = 11 : i64} {
  func.func @kernel(%arg0: i32, %arg1: memref<8x384xf32, #tpu.memory_space<vmem>>, %arg2: memref<40x256xf32, #tpu.memory_space<vmem>>, %arg3: memref<128x64xf32, #tpu.memory_space<vmem>>, %arg4: memref<128x8xf32, #tpu.memory_space<vmem>>) attributes {dimension_semantics = [#tpu.dimension_semantics<parallel>], iteration_bounds = array<i64: 2>, scalar_prefetch = 0 : i64, scratch_operands = 0 : i64, tpu.core_type = #tpu.core_type<tc>, window_params = [{pipeline_mode = #tpu.pipeline_mode<synchronous>, transform_indices = @transform_0, window_bounds = array<i64: 8, 384>}, {pipeline_mode = #tpu.pipeline_mode<synchronous>, transform_indices = @transform_1, window_bounds = array<i64: 40, 256>}, {transform_indices = @transform_2, window_bounds = array<i64: 128, 64>}, {transform_indices = @transform_3, window_bounds = array<i64: 128, 8>}]} {
    %c0 = arith.constant 0 : index
    %c0_0 = arith.constant 0 : index
    %0 = vector.load %arg1[%c0, %c0_0] : memref<8x384xf32, #tpu.memory_space<vmem>>, vector<8x8xf32>
    %c0_1 = arith.constant 0 : index
    %c128 = arith.constant 128 : index
    %1 = vector.load %arg1[%c0_1, %c128] : memref<8x384xf32, #tpu.memory_space<vmem>>, vector<8x32xf32>
    %c0_2 = arith.constant 0 : index
    %c256 = arith.constant 256 : index
    %2 = vector.load %arg1[%c0_2, %c256] : memref<8x384xf32, #tpu.memory_space<vmem>>, vector<8x64xf32>
    %c0_3 = arith.constant 0 : index
    %c0_4 = arith.constant 0 : index
    %3 = vector.load %arg2[%c0_3, %c0_4] : memref<40x256xf32, #tpu.memory_space<vmem>>, vector<32x32xf32>
    %c32 = arith.constant 32 : index
    %c0_5 = arith.constant 0 : index
    %4 = vector.load %arg2[%c32, %c0_5] : memref<40x256xf32, #tpu.memory_space<vmem>>, vector<1x32xf32>
    %c0_6 = arith.constant 0 : index
    %c128_7 = arith.constant 128 : index
    %5 = vector.load %arg2[%c0_6, %c128_7] : memref<40x256xf32, #tpu.memory_space<vmem>>, vector<32x128xf32>
    %c32_8 = arith.constant 32 : index
    %c128_9 = arith.constant 128 : index
    %6 = vector.load %arg2[%c32_8, %c128_9] : memref<40x256xf32, #tpu.memory_space<vmem>>, vector<1x128xf32>
    %cst = arith.constant dense<0.000000e+00> : vector<8x32xf32>
    %7 = tpu.matmul %1, %3, %cst {dimension_numbers = #tpu.dot_dimension_numbers<[1], [0], [0], [1], [0, 0, 1, 1], [], []>} : vector<8x32xf32>, vector<32x32xf32>, vector<8x32xf32> -> vector<8x32xf32>
    %8 = vector.broadcast %4 : vector<1x32xf32> to vector<8x32xf32>
    %9 = arith.addf %7, %8 : vector<8x32xf32>
    %cst_10 = arith.constant dense<0.000000e+00> : vector<8x32xf32>
    %10 = tpu.matmul %0, %9, %cst_10 {dimension_numbers = #tpu.dot_dimension_numbers<[1], [0], [0], [1], [0, 0, 1, 1], [], []>} : vector<8x8xf32>, vector<8x32xf32>, vector<8x32xf32> -> vector<8x32xf32>
    %cst_11 = arith.constant 0.000000e+00 : f32
    %11 = vector.broadcast %cst_11 : f32 to vector<8x32xf32>
    %12 = arith.maximumf %10, %11 : vector<8x32xf32>
    %cst_12 = arith.constant dense<0.000000e+00> : vector<8x128xf32>
    %13 = tpu.matmul %12, %5, %cst_12 {dimension_numbers = #tpu.dot_dimension_numbers<[1], [0], [0], [1], [0, 0, 1, 1], [], []>} : vector<8x32xf32>, vector<32x128xf32>, vector<8x128xf32> -> vector<8x128xf32>
    %14 = vector.broadcast %6 : vector<1x128xf32> to vector<8x128xf32>
    %15 = arith.addf %13, %14 : vector<8x128xf32>
    %16 = vector.extract_strided_slice %15 {offsets = [0, 0], sizes = [8, 64], strides = [1, 1]} : vector<8x128xf32> to vector<8x64xf32>
    %17 = vector.extract_strided_slice %15 {offsets = [0, 64], sizes = [8, 64], strides = [1, 1]} : vector<8x128xf32> to vector<8x64xf32>
    %18 = arith.mulf %16, %2 : vector<8x64xf32>
    %19 = arith.addf %18, %17 : vector<8x64xf32>
    %c0_13 = arith.constant 0 : index
    %c0_14 = arith.constant 0 : index
    %20 = vector.load %arg3[%c0_13, %c0_14] : memref<128x64xf32, #tpu.memory_space<vmem>>, vector<128x64xf32>
    %cst_15 = arith.constant dense<0.000000e+00> : vector<128x8xf32>
    %21 = tpu.matmul %20, %19, %cst_15 {dimension_numbers = #tpu.dot_dimension_numbers<[1], [1], [0], [0], [0, 0, 1, 0], [], []>} : vector<128x64xf32>, vector<8x64xf32>, vector<128x8xf32> -> vector<128x8xf32>
    %cst_16 = arith.constant 1.250000e-01 : f32
    %22 = vector.broadcast %cst_16 : f32 to vector<128x8xf32>
    %23 = arith.mulf %21, %22 : vector<128x8xf32>
    %24 = arith.negf %23 : vector<128x8xf32>
    %25 = math.exp %24 : vector<128x8xf32>
    %cst_17 = arith.constant 1.000000e+00 : f32
    %26 = vector.broadcast %cst_17 : f32 to vector<128x8xf32>
    %27 = arith.addf %26, %25 : vector<128x8xf32>
    %28 = arith.divf %26, %27 : vector<128x8xf32>
    %c0_18 = arith.constant 0 : index
    %c0_19 = arith.constant 0 : index
    %29 = vector.load %arg4[%c0_18, %c0_19] : memref<128x8xf32, #tpu.memory_space<vmem>>, vector<128x8xf32>
    tpu.vector_store %arg4[%c0_18, %c0_19], %28 {strides = array<i32>} : memref<128x8xf32, #tpu.memory_space<vmem>>, vector<128x8xf32>,
    return
  }
  func.func @transform_0(%arg0: i32) -> (i32, i32) {
    %c0_i32 = arith.constant 0 : i32
    %c0_i32_0 = arith.constant 0 : i32
    %c0_i32_1 = arith.constant 0 : i32
    return %c0_i32, %c0_i32_0 : i32, i32
  }
  func.func @transform_1(%arg0: i32) -> (i32, i32) {
    %c0_i32 = arith.constant 0 : i32
    %c0_i32_0 = arith.constant 0 : i32
    %c0_i32_1 = arith.constant 0 : i32
    return %c0_i32, %c0_i32_0 : i32, i32
  }
  func.func @transform_2(%arg0: i32) -> (i32, i32) {
    %c0_i32 = arith.constant 0 : i32
    %c0_i32_0 = arith.constant 0 : i32
    return %arg0, %c0_i32 : i32, i32
  }
  func.func @transform_3(%arg0: i32) -> (i32, i32) {
    %c0_i32 = arith.constant 0 : i32
    %c0_i32_0 = arith.constant 0 : i32
    return %arg0, %c0_i32 : i32, i32
  }
}

</mosaic_0001>

<llo_original>
// kernel: tpu_custom_call.1
$region0: #{tpu_custom_call.1}
  #allocation0 [shape = 'u32[]', space=smem, size = 0x4, offset = 0x4, fixed_abs, tag = 'smem constant byte address 0x4 - core index']
  #allocation1 [shape = 'u32[144,128]{1,0:T(1,128)}', space=vmem, size = 0x12000, scoped, tag = 'internal scratch']
  %s0 = inlined_call_operand.vmem [shape: f32[8,384], index: 0, kind: input, shape index: {}]
  %s1 = inlined_call_operand.vmem [shape: f32[40,256], index: 1, kind: input, shape index: {}]
  %s2 = inlined_call_operand.vmem [shape: f32[256,64], index: 2, kind: input, shape index: {}]
  %s3 = inlined_call_operand.vmem [shape: f32[256,8], index: 3, kind: output, shape index: {}]
  %s4 = sld [smem:[#allocation0]]
  $region45: #{tpu_custom_call.1} parent=0
    _
  %s6 = ssub.s32 1, %s4
  %s7 = scalar_select 0, %s6, %s4
  loop: start=0, step=1, limit=4
  $region2: #{tpu_custom_call.1} parent=0 // loop_pre_header
    _
  $region3: #{tpu_custom_call.1} parent=0 // loop_header
    %s9 = sphi 0, %s13
    %p10 = scmp.ge.s32.totalorder %s9, 4
    %s17 = sphi 0, %s17
    %s19 = sphi 0, %s17
    %s20 = sphi 0, %s19
    %s34 = sphi 0, %s20
    %s38 = sphi 0, %s38
    %s40 = sphi 0, %s38
    %s41 = sphi 0, %s40
    %s55 = sphi 0, %s41
    %s61 = sphi 0, %s63
    %s64 = sphi 0, %s61
    %s65 = sphi 0, %s64
    %s81 = sphi 0, %s65
    %s87 = sphi 0, %s89
    %s90 = sphi 0, %s87
    %s91 = sphi 0, %s90
    %s107 = sphi 0, %s91
  $region4: #{tpu_custom_call.1} parent=0 // loop_header_branch
    %12 = sbr.rel (%p10) target = $region8
  $region5: #{tpu_custom_call.1} parent=0 // loop_body
    %s14 = ssub.s32 %s9, 1
    %s15 = ssub.s32 %s9, 2
    %s16 = sadd.s32 %s9, 1
    %s18 = sadd.s32 %s17, 1
    %p21 = scmp.eq.s32.totalorder %s9, 1
    %p22 = scmp.ne.s32.totalorder %s17, %s19
    %p23 = scmp.eq.s32.totalorder %s9, 0
    %p24 = por %p22, %p23
    %p25 = scmp.ne.s32.totalorder %s17, %s19
    %p26 = scmp.eq.s32.totalorder %s14, 1
    %p27 = por %p25, %p26
    %p28 = scmp.ne.s32.totalorder %s19, %s20
    %p29 = scmp.eq.s32.totalorder %s14, 0
    %p30 = por %p28, %p29
    %p31 = scmp.ne.s32.totalorder %s19, %s20
    %p32 = scmp.eq.s32.totalorder %s15, 1
    %p33 = por %p31, %p32
    %p35 = scmp.ne.s32.totalorder %s20, %s34
    %p36 = scmp.eq.s32.totalorder %s15, 0
    %p37 = por %p35, %p36
    %s39 = sadd.s32 %s38, 1
    %p42 = scmp.eq.s32.totalorder %s9, 1
    %p43 = scmp.ne.s32.totalorder %s38, %s40
    %p44 = scmp.eq.s32.totalorder %s9, 0
    %p45 = por %p43, %p44
    %p46 = scmp.ne.s32.totalorder %s38, %s40
    %p47 = scmp.eq.s32.totalorder %s14, 1
    %p48 = por %p46, %p47
    %p49 = scmp.ne.s32.totalorder %s40, %s41
    %p50 = scmp.eq.s32.totalorder %s14, 0
    %p51 = por %p49, %p50
    %p52 = scmp.ne.s32.totalorder %s40, %s41
    %p53 = scmp.eq.s32.totalorder %s15, 1
    %p54 = por %p52, %p53
    %p56 = scmp.ne.s32.totalorder %s41, %s55
    %p57 = scmp.eq.s32.totalorder %s15, 0
    %p58 = por %p56, %p57
    %s59 = ssub.s32 %s9, %s16
    %p60 = scmp.eq.s32.totalorder %s59, 0
    %s62 = sadd.s32 %s61, 1
    %s63 = scalar_select %p60, %s61, %s62
    %p66 = pneg %p60
    %p67 = scmp.eq.s32.totalorder %s9, 1
    %p68 = por %p66, %p67
    %p69 = scmp.ne.s32.totalorder %s61, %s64
    %p70 = scmp.eq.s32.totalorder %s9, 0
    %p71 = por %p69, %p70
    %p72 = scmp.ne.s32.totalorder %s61, %s64
    %p73 = scmp.eq.s32.totalorder %s14, 1
    %p74 = por %p72, %p73
    %p75 = scmp.ne.s32.totalorder %s64, %s65
    %p76 = scmp.eq.s32.totalorder %s14, 0
    %p77 = por %p75, %p76
    %p78 = scmp.ne.s32.totalorder %s64, %s65
    %p79 = scmp.eq.s32.totalorder %s15, 1
    %p80 = por %p78, %p79
    %p82 = scmp.ne.s32.totalorder %s65, %s81
    %p83 = scmp.eq.s32.totalorder %s15, 0
    %p84 = por %p82, %p83
    %s85 = ssub.s32 %s9, %s16
    %p86 = scmp.eq.s32.totalorder %s85, 0
    %s88 = sadd.s32 %s87, 1
    %s89 = scalar_select %p86, %s87, %s88
    %p92 = pneg %p86
    %p93 = scmp.eq.s32.totalorder %s9, 1
    %p94 = por %p92, %p93
    %p95 = scmp.ne.s32.totalorder %s87, %s90
    %p96 = scmp.eq.s32.totalorder %s9, 0
    %p97 = por %p95, %p96
    %p98 = scmp.ne.s32.totalorder %s87, %s90
    %p99 = scmp.eq.s32.totalorder %s14, 1
    %p100 = por %p98, %p99
    %p101 = scmp.ne.s32.totalorder %s90, %s91
    %p102 = scmp.eq.s32.totalorder %s14, 0
    %p103 = por %p101, %p102
    %p104 = scmp.ne.s32.totalorder %s90, %s91
    %p105 = scmp.eq.s32.totalorder %s15, 1
    %p106 = por %p104, %p105
    %p108 = scmp.ne.s32.totalorder %s91, %s107
    %p109 = scmp.eq.s32.totalorder %s15, 0
    %p110 = por %p108, %p109
    %p111 = scmp.le.s32.totalorder 1, %s9
    %p112 = scmp.lt.s32.totalorder %s9, 3
    %p113 = pnand %p111, %p112
    %p114 = pneg %p113
    // Predicated region
    $region9: #{tpu_custom_call.1} parent=5 // pred_check
      _
    $region10: #{tpu_custom_call.1} parent=5 // pred_check_branch
      %116 = sbr.rel (%p113) target = $region12
    $region11: #{tpu_custom_call.1} parent=5 // pred_region
      %s117 = ssub.s32 %s9, 1
      // Predicated region
      $region13: #{tpu_custom_call.1} parent=11 // pred_check
        %p118 = pneg %p30
      $region14: #{tpu_custom_call.1} parent=11 // pred_check_branch
        %120 = sbr.rel (%p118) target = $region16
      $region15: #{tpu_custom_call.1} parent=11 // pred_region
        _
      $region16: #{tpu_custom_call.1} parent=11 // pred_fallthru
        _
      // Predicated region
      $region17: #{tpu_custom_call.1} parent=11 // pred_check
        %p121 = pneg %p51
      $region18: #{tpu_custom_call.1} parent=11 // pred_check_branch
        %123 = sbr.rel (%p121) target = $region20
      $region19: #{tpu_custom_call.1} parent=11 // pred_region
        _
      $region20: #{tpu_custom_call.1} parent=11 // pred_fallthru
        _
    $region12: #{tpu_custom_call.1} parent=5 // pred_fallthru
      _
    %p124 = scmp.lt.s32.totalorder %s9, 2
    // Predicated region
    $region21: #{tpu_custom_call.1} parent=5 // pred_check
      %p125 = pneg %p124
    $region22: #{tpu_custom_call.1} parent=5 // pred_check_branch
      %127 = sbr.rel (%p125) target = $region24
    $region23: #{tpu_custom_call.1} parent=5 // pred_region
      // Predicated region
      $region25: #{tpu_custom_call.1} parent=23 // pred_check
        %p128 = pneg %p71
      $region26: #{tpu_custom_call.1} parent=23 // pred_check_branch
        %130 = sbr.rel (%p128) target = $region28
      $region27: #{tpu_custom_call.1} parent=23 // pred_region
        %s131 = smul.u32 16, %s9
        %p132 = scmp.lt.s32.totalorder %s131, 31
        %s133 = scalar_select %p132, %s131, 31
        %s134 = smul.addr %s133, 8
        %s135 = scalar_lea.vmem %s2, %s134
        %s136 = smul.u32 16, %s9
      $region28: #{tpu_custom_call.1} parent=23 // pred_fallthru
        _
    $region24: #{tpu_custom_call.1} parent=5 // pred_fallthru
      _
    %p137 = scmp.le.s32.totalorder 1, %s9
    %p138 = scmp.lt.s32.totalorder %s9, 3
    %p139 = pnand %p137, %p138
    %p140 = pneg %p139
    // Predicated region
    $region29: #{tpu_custom_call.1} parent=5 // pred_check
      _
    $region30: #{tpu_custom_call.1} parent=5 // pred_check_branch
      %142 = sbr.rel (%p139) target = $region32
    $region31: #{tpu_custom_call.1} parent=5 // pred_region
      %s143 = ssub.s32 %s9, 1
      %p144 = pneg %p30
      %p145 = pneg %p27
      %p146 = pneg %p51
      %p147 = pneg %p48
      %s148 = smul.u32 16, %s14
      %p149 = scmp.lt.s32.totalorder %s148, 31
      %s150 = scalar_select %p149, %s148, 31
      %s151 = smul.addr %s150, 8
      %s152 = scalar_lea.vmem %s2, %s151
      %p153 = pneg %p77
      %p154 = pneg %p74
      %p155 = pneg %p103
      %p156 = pneg %p100
      %s157 = smul.u32 16, %s14
      %p158 = scmp.lt.s32.totalorder %s157, 31
      %s159 = scalar_select %p158, %s157, 31
      %s160 = smul.addr %s159, 8
      %s161 = scalar_lea.vmem %s3, %s160
      %s162 = smul.u32 16, %s14
      %p163 = scmp.lt.s32.totalorder %s162, 31
      %s164 = scalar_select %p163, %s162, 31
      %s165 = smul.addr %s164, 8
      %s166 = scalar_lea.vmem %s2, %s165
      %s167 = smul.u32 16, %s14
      %s168 = smul.u32 16, %s14
      %p169 = scmp.lt.s32.totalorder %s168, 31
      %s170 = scalar_select %p169, %s168, 31
      %s171 = smul.addr %s170, 8
      %s172 = scalar_lea.vmem %s3, %s171
      %s173 = smul.u32 16, %s14
      %v174 = vld [vmem:[%s0] sm:$0xff]
      %v175 = vld [vmem:[%s0 + $0x8] sm:$0xff]
      %v176 = vld [vmem:[%s0 + $0x10] sm:$0xff]
      %v177 = vld [vmem:[%s1] sm:$0xff]
      %v178 = vld [vmem:[%s1 + $0x10] sm:$0xff]
      %v179 = vld [vmem:[%s1 + $0x20] sm:$0xff]
      %v180 = vld [vmem:[%s1 + $0x30] sm:$0xff]
      %v181 = vld [vmem:[%s1 + $0x40] ss:$0 sm:$0xff]
      %v182 = vld [vmem:[%s1 + $0x8] sm:$0xff]
      %v183 = vld [vmem:[%s1 + $0x18] sm:$0xff]
      %v184 = vld [vmem:[%s1 + $0x28] sm:$0xff]
      %v185 = vld [vmem:[%s1 + $0x38] sm:$0xff]
      %v186 = vld [vmem:[%s1 + $0x48] ss:$0 sm:$0xff]
      %vm187 = vcmask 261120
      %v189 = vsel %vm187, %v175, 0
      %191 = vmatprep.subr.mxu0 0.0
      %192 = vmatpush1.msra.mxu0 %v177
      %193 = vmatprep.subr.mxu0 0.0
      %194 = vmatpush1.msra.mxu0 %v178
      %195 = vmatprep.subr.mxu0 0.0
      %196 = vmatpush1.msra.mxu0 %v179
      %197 = vmatprep.subr.mxu0 0.0
      %198 = vmatpush1.msra.mxu0 %v180
      %199 = vmatprep.subr.mxu0 0.0
      %200 = vmatpush1.msra.mxu0 0.0
      %201 = vmatprep.subr.mxu0 0.0
      %202 = vmatpush1.msra.mxu0 0.0
      %203 = vmatprep.subr.mxu0 0.0
      %204 = vmatpush1.msra.mxu0 0.0
      %205 = vmatprep.subr.mxu0 0.0
      %206 = vmatpush1.msra.mxu0 0.0
      %207 = vmatprep.subr.mxu0 0.0
      %208 = vmatpush1.msra.mxu0 0.0
      %209 = vmatprep.subr.mxu0 0.0
      %210 = vmatpush1.msra.mxu0 0.0
      %211 = vmatprep.subr.mxu0 0.0
      %212 = vmatpush1.msra.mxu0 0.0
      %213 = vmatprep.subr.mxu0 0.0
      %214 = vmatpush1.msra.mxu0 0.0
      %215 = vmatprep.subr.mxu0 0.0
      %216 = vmatpush1.msra.mxu0 0.0
      %217 = vmatprep.subr.mxu0 0.0
      %218 = vmatpush1.msra.mxu0 0.0
      %219 = vmatprep.subr.mxu0 0.0
      %220 = vmatpush1.msra.mxu0 0.0
      %221 = vmatprep.subr.mxu0 0.0
      %222 = vmatpush1.msra.mxu0 0.0
      %223 = vmatprep.subr.mxu0 0.0
      %224 = vmatpush1.msra.mxu0 0.0
      %225 = vmatprep.subr.mxu0 0.0
      %226 = vmatpush1.msra.mxu0 0.0
      %227 = vmatprep.subr.mxu0 0.0
      %228 = vmatpush1.msra.mxu0 0.0
      %229 = vmatprep.subr.mxu0 0.0
      %230 = vmatpush1.msra.mxu0 0.0
      %231 = vmatprep.subr.mxu0 0.0
      %232 = vmatpush1.msra.mxu0 0.0
      %233 = vmatprep.subr.mxu0 0.0
      %234 = vmatpush1.msra.mxu0 0.0
      %235 = vmatprep.subr.mxu0 0.0
      %236 = vmatpush1.msra.mxu0 0.0
      %237 = vmatprep.subr.mxu0 0.0
      %238 = vmatpush1.msra.mxu0 0.0
      %239 = vmatprep.subr.mxu0 0.0
      %240 = vmatpush1.msra.mxu0 0.0
      %241 = vmatprep.subr.mxu0 0.0
      %242 = vmatpush1.msra.mxu0 0.0
      %243 = vmatprep.subr.mxu0 0.0
      %244 = vmatpush1.msra.mxu0 0.0
      %245 = vmatprep.subr.mxu0 0.0
      %246 = vmatpush1.msra.mxu0 0.0
      %247 = vmatprep.subr.mxu0 0.0
      %248 = vmatpush1.msra.mxu0 0.0
      %249 = vmatprep.subr.mxu0 0.0
      %250 = vmatpush1.msra.mxu0 0.0
      %251 = vmatprep.subr.mxu0 0.0
      %252 = vmatpush1.msra.mxu0 0.0
      %253 = vmatprep.subr.mxu0 0.0
      %254 = vmatpush1.msra.mxu0 0.0
      %255 = vmatprep.mubr.f32.mxu0 0.0
      %256 = vmatmul.mubr.f32.gmra.mrb[0].mxu0 %v189
      %v257 = vpop.f32.mrb[0].mxu0
      %v258 = vadd.f32 %v181, %v257
      %v259 = vpop.f32.mrb[0].mxu0
      %260 = vdwg.mxu0
      %vm261 = vcmask 64512
      %v263 = vsel %vm261, %v174, 0
      %265 = vmatprep.subr.mxu0 0.0
      %266 = vmatpush1.msra.mxu0 %v258
      %267 = vmatprep.subr.mxu0 0.0
      %268 = vmatpush1.msra.mxu0 0.0
      %269 = vmatprep.subr.mxu0 0.0
      %270 = vmatpush1.msra.mxu0 0.0
      %271 = vmatprep.subr.mxu0 0.0
      %272 = vmatpush1.msra.mxu0 0.0
      %273 = vmatprep.subr.mxu0 0.0
      %274 = vmatpush1.msra.mxu0 0.0
      %275 = vmatprep.subr.mxu0 0.0
      %276 = vmatpush1.msra.mxu0 0.0
      %277 = vmatprep.subr.mxu0 0.0
      %278 = vmatpush1.msra.mxu0 0.0
      %279 = vmatprep.subr.mxu0 0.0
      %280 = vmatpush1.msra.mxu0 0.0
      %281 = vmatprep.subr.mxu0 0.0
      %282 = vmatpush1.msra.mxu0 0.0
      %283 = vmatprep.subr.mxu0 0.0
      %284 = vmatpush1.msra.mxu0 0.0
      %285 = vmatprep.subr.mxu0 0.0
      %286 = vmatpush1.msra.mxu0 0.0
      %287 = vmatprep.subr.mxu0 0.0
      %288 = vmatpush1.msra.mxu0 0.0
      %289 = vmatprep.subr.mxu0 0.0
      %290 = vmatpush1.msra.mxu0 0.0
      %291 = vmatprep.subr.mxu0 0.0
      %292 = vmatpush1.msra.mxu0 0.0
      %293 = vmatprep.subr.mxu0 0.0
      %294 = vmatpush1.msra.mxu0 0.0
      %295 = vmatprep.subr.mxu0 0.0
      %296 = vmatpush1.msra.mxu0 0.0
      %297 = vmatprep.subr.mxu0 0.0
      %298 = vmatpush1.msra.mxu0 0.0
      %299 = vmatprep.subr.mxu0 0.0
      %300 = vmatpush1.msra.mxu0 0.0
      %301 = vmatprep.subr.mxu0 0.0
      %302 = vmatpush1.msra.mxu0 0.0
      %303 = vmatprep.subr.mxu0 0.0
      %304 = vmatpush1.msra.mxu0 0.0
      %305 = vmatprep.subr.mxu0 0.0
      %306 = vmatpush1.msra.mxu0 0.0
      %307 = vmatprep.subr.mxu0 0.0
      %308 = vmatpush1.msra.mxu0 0.0
      %309 = vmatprep.subr.mxu0 0.0
      %310 = vmatpush1.msra.mxu0 0.0
      %311 = vmatprep.subr.mxu0 0.0
      %312 = vmatpush1.msra.mxu0 0.0
      %313 = vmatprep.subr.mxu0 0.0
      %314 = vmatpush1.msra.mxu0 0.0
      %315 = vmatprep.subr.mxu0 0.0
      %316 = vmatpush1.msra.mxu0 0.0
      %317 = vmatprep.subr.mxu0 0.0
      %318 = vmatpush1.msra.mxu0 0.0
      %319 = vmatprep.subr.mxu0 0.0
      %320 = vmatpush1.msra.mxu0 0.0
      %321 = vmatprep.subr.mxu0 0.0
      %322 = vmatpush1.msra.mxu0 0.0
      %323 = vmatprep.subr.mxu0 0.0
      %324 = vmatpush1.msra.mxu0 0.0
      %325 = vmatprep.subr.mxu0 0.0
      %326 = vmatpush1.msra.mxu0 0.0
      %327 = vmatprep.subr.mxu0 0.0
      %328 = vmatpush1.msra.mxu0 0.0
      %329 = vmatprep.mubr.f32.mxu0 0.0
      %330 = vmatmul.mubr.f32.gmra.mrb[0].mxu0 %v263
      %v331 = vpop.f32.mrb[0].mxu0
      %v332 = vadd.f32 0.0, %v331
      %v333 = vpop.f32.mrb[0].mxu0
      %334 = vdwg.mxu0
      %v335 = vmax.f32 %v332, 0.0
      %v337 = vsel %vm187, %v335, 0
      %339 = vmatprep.subr.mxu0 0.0
      %340 = vmatpush1.msra.mxu0 %v182
      %341 = vmatprep.subr.mxu0 0.0
      %342 = vmatpush1.msra.mxu0 %v183
      %343 = vmatprep.subr.mxu0 0.0
      %344 = vmatpush1.msra.mxu0 %v184
      %345 = vmatprep.subr.mxu0 0.0
      %346 = vmatpush1.msra.mxu0 %v185
      %347 = vmatprep.subr.mxu0 0.0
      %348 = vmatpush1.msra.mxu0 0.0
      %349 = vmatprep.subr.mxu0 0.0
      %350 = vmatpush1.msra.mxu0 0.0
      %351 = vmatprep.subr.mxu0 0.0
      %352 = vmatpush1.msra.mxu0 0.0
      %353 = vmatprep.subr.mxu0 0.0
      %354 = vmatpush1.msra.mxu0 0.0
      %355 = vmatprep.subr.mxu0 0.0
      %356 = vmatpush1.msra.mxu0 0.0
      %357 = vmatprep.subr.mxu0 0.0
      %358 = vmatpush1.msra.mxu0 0.0
      %359 = vmatprep.subr.mxu0 0.0
      %360 = vmatpush1.msra.mxu0 0.0
      %361 = vmatprep.subr.mxu0 0.0
      %362 = vmatpush1.msra.mxu0 0.0
      %363 = vmatprep.subr.mxu0 0.0
      %364 = vmatpush1.msra.mxu0 0.0
      %365 = vmatprep.subr.mxu0 0.0
      %366 = vmatpush1.msra.mxu0 0.0
      %367 = vmatprep.subr.mxu0 0.0
      %368 = vmatpush1.msra.mxu0 0.0
      %369 = vmatprep.subr.mxu0 0.0
      %370 = vmatpush1.msra.mxu0 0.0
      %371 = vmatprep.subr.mxu0 0.0
      %372 = vmatpush1.msra.mxu0 0.0
      %373 = vmatprep.subr.mxu0 0.0
      %374 = vmatpush1.msra.mxu0 0.0
      %375 = vmatprep.subr.mxu0 0.0
      %376 = vmatpush1.msra.mxu0 0.0
      %377 = vmatprep.subr.mxu0 0.0
      %378 = vmatpush1.msra.mxu0 0.0
      %379 = vmatprep.subr.mxu0 0.0
      %380 = vmatpush1.msra.mxu0 0.0
      %381 = vmatprep.subr.mxu0 0.0
      %382 = vmatpush1.msra.mxu0 0.0
      %383 = vmatprep.subr.mxu0 0.0
      %384 = vmatpush1.msra.mxu0 0.0
      %385 = vmatprep.subr.mxu0 0.0
      %386 = vmatpush1.msra.mxu0 0.0
      %387 = vmatprep.subr.mxu0 0.0
      %388 = vmatpush1.msra.mxu0 0.0
      %389 = vmatprep.subr.mxu0 0.0
      %390 = vmatpush1.msra.mxu0 0.0
      %391 = vmatprep.subr.mxu0 0.0
      %392 = vmatpush1.msra.mxu0 0.0
      %393 = vmatprep.subr.mxu0 0.0
      %394 = vmatpush1.msra.mxu0 0.0
      %395 = vmatprep.subr.mxu0 0.0
      %396 = vmatpush1.msra.mxu0 0.0
      %397 = vmatprep.subr.mxu0 0.0
      %398 = vmatpush1.msra.mxu0 0.0
      %399 = vmatprep.subr.mxu0 0.0
      %400 = vmatpush1.msra.mxu0 0.0
      %401 = vmatprep.subr.mxu0 0.0
      %402 = vmatpush1.msra.mxu0 0.0
      %403 = vmatprep.mubr.f32.mxu0 0.0
      %404 = vmatmul.mubr.f32.gmra.mrb[0].mxu0 %v337
      %v405 = vpop.f32.mrb[0].mxu0
      %v406 = vadd.f32 %v186, %v405
      %v407 = vpop.f32.mrb[0].mxu0
      %408 = vdwg.mxu0
      %v409 = vmul.f32 %v406, %v176
      %411 = vrot.lane.b32.xlu0 %v406, 64
      %v412 = vpop.permute.xlu0 %411
      %v414 = vadd.f32 %v409, %v412
      %v415 = vld [vmem:[%s166] sm:$0xff]
      %v416 = vld [vmem:[%s166 + $0x8] sm:$0xff]
      %v417 = vld [vmem:[%s166 + $0x10] sm:$0xff]
      %v418 = vld [vmem:[%s166 + $0x18] sm:$0xff]
      %v419 = vld [vmem:[%s166 + $0x20] sm:$0xff]
      %v420 = vld [vmem:[%s166 + $0x28] sm:$0xff]
      %v421 = vld [vmem:[%s166 + $0x30] sm:$0xff]
      %v422 = vld [vmem:[%s166 + $0x38] sm:$0xff]
      %v423 = vld [vmem:[%s166 + $0x40] sm:$0xff]
      %v424 = vld [vmem:[%s166 + $0x48] sm:$0xff]
      %v425 = vld [vmem:[%s166 + $0x50] sm:$0xff]
      %v426 = vld [vmem:[%s166 + $0x58] sm:$0xff]
      %v427 = vld [vmem:[%s166 + $0x60] sm:$0xff]
      %v428 = vld [vmem:[%s166 + $0x68] sm:$0xff]
      %v429 = vld [vmem:[%s166 + $0x70] sm:$0xff]
      %v430 = vld [vmem:[%s166 + $0x78] sm:$0xff]
      %vm431 = vcmask 523264
      %v433 = vsel %vm431, %v415, 0
      %v436 = vsel %vm431, %v416, 0
      %v439 = vsel %vm431, %v417, 0
      %v442 = vsel %vm431, %v418, 0
      %v445 = vsel %vm431, %v419, 0
      %v448 = vsel %vm431, %v420, 0
      %v451 = vsel %vm431, %v421, 0
      %v454 = vsel %vm431, %v422, 0
      %v457 = vsel %vm431, %v423, 0
      %v460 = vsel %vm431, %v424, 0
      %v463 = vsel %vm431, %v425, 0
      %v466 = vsel %vm431, %v426, 0
      %v469 = vsel %vm431, %v427, 0
      %v472 = vsel %vm431, %v428, 0
      %v475 = vsel %vm431, %v429, 0
      %v478 = vsel %vm431, %v430, 0
      %v481 = vsel %vm431, %v414, 0
      %483 = vmatprep.subr.mxu0 0.0
      %484 = vmatpush1.xpose.msra.mxu0 %v481
      %485 = vmatprep.subr.mxu0 0.0
      %486 = vmatpush1.xpose.msra.mxu0 0.0
      %487 = vmatprep.subr.mxu0 0.0
      %488 = vmatpush1.xpose.msra.mxu0 0.0
      %489 = vmatprep.subr.mxu0 0.0
      %490 = vmatpush1.xpose.msra.mxu0 0.0
      %491 = vmatprep.subr.mxu0 0.0
      %492 = vmatpush1.xpose.msra.mxu0 0.0
      %493 = vmatprep.subr.mxu0 0.0
      %494 = vmatpush1.xpose.msra.mxu0 0.0
      %495 = vmatprep.subr.mxu0 0.0
      %496 = vmatpush1.xpose.msra.mxu0 0.0
      %497 = vmatprep.subr.mxu0 0.0
      %498 = vmatpush1.xpose.msra.mxu0 0.0
      %499 = vmatprep.subr.mxu0 0.0
      %500 = vmatpush1.xpose.msra.mxu0 0.0
      %501 = vmatprep.subr.mxu0 0.0
      %502 = vmatpush1.xpose.msra.mxu0 0.0
      %503 = vmatprep.subr.mxu0 0.0
      %504 = vmatpush1.xpose.msra.mxu0 0.0
      %505 = vmatprep.subr.mxu0 0.0
      %506 = vmatpush1.xpose.msra.mxu0 0.0
      %507 = vmatprep.subr.mxu0 0.0
      %508 = vmatpush1.xpose.msra.mxu0 0.0
      %509 = vmatprep.subr.mxu0 0.0
      %510 = vmatpush1.xpose.msra.mxu0 0.0
      %511 = vmatprep.subr.mxu0 0.0
      %512 = vmatpush1.xpose.msra.mxu0 0.0
      %513 = vmatprep.subr.mxu0 0.0
      %514 = vmatpush1.xpose.msra.mxu0 0.0
      %515 = vmatprep.subr.mxu0 0.0
      %516 = vmatpush1.xpose.msra.mxu0 0.0
      %517 = vmatprep.subr.mxu0 0.0
      %518 = vmatpush1.xpose.msra.mxu0 0.0
      %519 = vmatprep.subr.mxu0 0.0
      %520 = vmatpush1.xpose.msra.mxu0 0.0
      %521 = vmatprep.subr.mxu0 0.0
      %522 = vmatpush1.xpose.msra.mxu0 0.0
      %523 = vmatprep.subr.mxu0 0.0
      %524 = vmatpush1.xpose.msra.mxu0 0.0
      %525 = vmatprep.subr.mxu0 0.0
      %526 = vmatpush1.xpose.msra.mxu0 0.0
      %527 = vmatprep.subr.mxu0 0.0
      %528 = vmatpush1.xpose.msra.mxu0 0.0
      %529 = vmatprep.subr.mxu0 0.0
      %530 = vmatpush1.xpose.msra.mxu0 0.0
      %531 = vmatprep.subr.mxu0 0.0
      %532 = vmatpush1.xpose.msra.mxu0 0.0
      %533 = vmatprep.subr.mxu0 0.0
      %534 = vmatpush1.xpose.msra.mxu0 0.0
      %535 = vmatprep.subr.mxu0 0.0
      %536 = vmatpush1.xpose.msra.mxu0 0.0
      %537 = vmatprep.subr.mxu0 0.0
      %538 = vmatpush1.xpose.msra.mxu0 0.0
      %539 = vmatprep.subr.mxu0 0.0
      %540 = vmatpush1.xpose.msra.mxu0 0.0
      %541 = vmatprep.subr.mxu0 0.0
      %542 = vmatpush1.xpose.msra.mxu0 0.0
      %543 = vmatprep.subr.mxu0 0.0
      %544 = vmatpush1.xpose.msra.mxu0 0.0
      %545 = vmatprep.subr.mxu0 0.0
      %546 = vmatpush1.xpose.msra.mxu0 0.0
      %547 = vmatprep.mubr.f32.mxu0 0.0
      %548 = vmatmul.mubr.f32.gmra.mrb[0].mxu0 %v433
      %v549 = vpop.f32.mrb[0].mxu0
      %v550 = vadd.f32 0.0, %v549
      %v551 = vpop.f32.mrb[0].mxu0
      %552 = vmatprep.mubr.f32.mxu0 0.0
      %553 = vmatmul.mubr.f32.gmra.mrb[0].mxu0 %v436
      %v554 = vpop.f32.mrb[0].mxu0
      %v555 = vadd.f32 0.0, %v554
      %v556 = vpop.f32.mrb[0].mxu0
      %557 = vmatprep.mubr.f32.mxu0 0.0
      %558 = vmatmul.mubr.f32.gmra.mrb[0].mxu0 %v439
      %v559 = vpop.f32.mrb[0].mxu0
      %v560 = vadd.f32 0.0, %v559
      %v561 = vpop.f32.mrb[0].mxu0
      %562 = vmatprep.mubr.f32.mxu0 0.0
      %563 = vmatmul.mubr.f32.gmra.mrb[0].mxu0 %v442
      %v564 = vpop.f32.mrb[0].mxu0
      %v565 = vadd.f32 0.0, %v564
      %v566 = vpop.f32.mrb[0].mxu0
      %567 = vmatprep.mubr.f32.mxu0 0.0
      %568 = vmatmul.mubr.f32.gmra.mrb[0].mxu0 %v445
      %v569 = vpop.f32.mrb[0].mxu0
      %v570 = vadd.f32 0.0, %v569
      %v571 = vpop.f32.mrb[0].mxu0
      %572 = vmatprep.mubr.f32.mxu0 0.0
      %573 = vmatmul.mubr.f32.gmra.mrb[0].mxu0 %v448
      %v574 = vpop.f32.mrb[0].mxu0
      %v575 = vadd.f32 0.0, %v574
      %v576 = vpop.f32.mrb[0].mxu0
      %577 = vmatprep.mubr.f32.mxu0 0.0
      %578 = vmatmul.mubr.f32.gmra.mrb[0].mxu0 %v451
      %v579 = vpop.f32.mrb[0].mxu0
      %v580 = vadd.f32 0.0, %v579
      %v581 = vpop.f32.mrb[0].mxu0
      %582 = vmatprep.mubr.f32.mxu0 0.0
      %583 = vmatmul.mubr.f32.gmra.mrb[0].mxu0 %v454
      %v584 = vpop.f32.mrb[0].mxu0
      %v585 = vadd.f32 0.0, %v584
      %v586 = vpop.f32.mrb[0].mxu0
      %587 = vmatprep.mubr.f32.mxu0 0.0
      %588 = vmatmul.mubr.f32.gmra.mrb[0].mxu0 %v457
      %v589 = vpop.f32.mrb[0].mxu0
      %v590 = vadd.f32 0.0, %v589
      %v591 = vpop.f32.mrb[0].mxu0
      %592 = vmatprep.mubr.f32.mxu0 0.0
      %593 = vmatmul.mubr.f32.gmra.mrb[0].mxu0 %v460
      %v594 = vpop.f32.mrb[0].mxu0
      %v595 = vadd.f32 0.0, %v594
      %v596 = vpop.f32.mrb[0].mxu0
      %597 = vmatprep.mubr.f32.mxu0 0.0
      %598 = vmatmul.mubr.f32.gmra.mrb[0].mxu0 %v463
      %v599 = vpop.f32.mrb[0].mxu0
      %v600 = vadd.f32 0.0, %v599
      %v601 = vpop.f32.mrb[0].mxu0
      %602 = vmatprep.mubr.f32.mxu0 0.0
      %603 = vmatmul.mubr.f32.gmra.mrb[0].mxu0 %v466
      %v604 = vpop.f32.mrb[0].mxu0
      %v605 = vadd.f32 0.0, %v604
      %v606 = vpop.f32.mrb[0].mxu0
      %607 = vmatprep.mubr.f32.mxu0 0.0
      %608 = vmatmul.mubr.f32.gmra.mrb[0].mxu0 %v469
      %v609 = vpop.f32.mrb[0].mxu0
      %v610 = vadd.f32 0.0, %v609
      %v611 = vpop.f32.mrb[0].mxu0
      %612 = vmatprep.mubr.f32.mxu0 0.0
      %613 = vmatmul.mubr.f32.gmra.mrb[0].mxu0 %v472
      %v614 = vpop.f32.mrb[0].mxu0
      %v615 = vadd.f32 0.0, %v614
      %v616 = vpop.f32.mrb[0].mxu0
      %617 = vmatprep.mubr.f32.mxu0 0.0
      %618 = vmatmul.mubr.f32.gmra.mrb[0].mxu0 %v475
      %v619 = vpop.f32.mrb[0].mxu0
      %v620 = vadd.f32 0.0, %v619
      %v621 = vpop.f32.mrb[0].mxu0
      %622 = vmatprep.mubr.f32.mxu0 0.0
      %623 = vmatmul.mubr.f32.gmra.mrb[0].mxu0 %v478
      %v624 = vpop.f32.mrb[0].mxu0
      %v625 = vadd.f32 0.0, %v624
      %v626 = vpop.f32.mrb[0].mxu0
      %627 = vdwg.mxu0
      %v628 = vmul.f32 %v550, 0.125
      %v629 = vmul.f32 %v555, 0.125
      %v630 = vmul.f32 %v560, 0.125
      %v631 = vmul.f32 %v565, 0.125
      %v632 = vmul.f32 %v570, 0.125
      %v633 = vmul.f32 %v575, 0.125
      %v634 = vmul.f32 %v580, 0.125
      %v635 = vmul.f32 %v585, 0.125
      %v636 = vmul.f32 %v590, 0.125
      %v637 = vmul.f32 %v595, 0.125
      %v638 = vmul.f32 %v600, 0.125
      %v639 = vmul.f32 %v605, 0.125
      %v640 = vmul.f32 %v610, 0.125
      %v641 = vmul.f32 %v615, 0.125
      %v642 = vmul.f32 %v620, 0.125
      %v643 = vmul.f32 %v625, 0.125
      %v644 = vxor.u32 %v628, 2147483648
      %v645 = vxor.u32 %v629, 2147483648
      %v646 = vxor.u32 %v630, 2147483648
      %v647 = vxor.u32 %v631, 2147483648
      %v648 = vxor.u32 %v632, 2147483648
      %v649 = vxor.u32 %v633, 2147483648
      %v650 = vxor.u32 %v634, 2147483648
      %v651 = vxor.u32 %v635, 2147483648
      %v652 = vxor.u32 %v636, 2147483648
      %v653 = vxor.u32 %v637, 2147483648
      %v654 = vxor.u32 %v638, 2147483648
      %v655 = vxor.u32 %v639, 2147483648
      %v656 = vxor.u32 %v640, 2147483648
      %v657 = vxor.u32 %v641, 2147483648
      %v658 = vxor.u32 %v642, 2147483648
      %v659 = vxor.u32 %v643, 2147483648
      %v660 = vmul.f32 %v644, 1.442695
      %v661 = vpow.pop %v660
      %v662 = vmul.f32 %v645, 1.442695
      %v663 = vpow.pop %v662
      %v664 = vmul.f32 %v646, 1.442695
      %v665 = vpow.pop %v664
      %v666 = vmul.f32 %v647, 1.442695
      %v667 = vpow.pop %v666
      %v668 = vmul.f32 %v648, 1.442695
      %v669 = vpow.pop %v668
      %v670 = vmul.f32 %v649, 1.442695
      %v671 = vpow.pop %v670
      %v672 = vmul.f32 %v650, 1.442695
      %v673 = vpow.pop %v672
      %v674 = vmul.f32 %v651, 1.442695
      %v675 = vpow.pop %v674
      %v676 = vmul.f32 %v652, 1.442695
      %v677 = vpow.pop %v676
      %v678 = vmul.f32 %v653, 1.442695
      %v679 = vpow.pop %v678
      %v680 = vmul.f32 %v654, 1.442695
      %v681 = vpow.pop %v680
      %v682 = vmul.f32 %v655, 1.442695
      %v683 = vpow.pop %v682
      %v684 = vmul.f32 %v656, 1.442695
      %v685 = vpow.pop %v684
      %v686 = vmul.f32 %v657, 1.442695
      %v687 = vpow.pop %v686
      %v688 = vmul.f32 %v658, 1.442695
      %v689 = vpow.pop %v688
      %v690 = vmul.f32 %v659, 1.442695
      %v691 = vpow.pop %v690
      %v692 = vadd.f32 %v661, 1.0
      %v693 = vadd.f32 %v663, 1.0
      %v694 = vadd.f32 %v665, 1.0
      %v695 = vadd.f32 %v667, 1.0
      %v696 = vadd.f32 %v669, 1.0
      %v697 = vadd.f32 %v671, 1.0
      %v698 = vadd.f32 %v673, 1.0
      %v699 = vadd.f32 %v675, 1.0
      %v700 = vadd.f32 %v677, 1.0
      %v701 = vadd.f32 %v679, 1.0
      %v702 = vadd.f32 %v681, 1.0
      %v703 = vadd.f32 %v683, 1.0
      %v704 = vadd.f32 %v685, 1.0
      %v705 = vadd.f32 %v687, 1.0
      %v706 = vadd.f32 %v689, 1.0
      %v707 = vadd.f32 %v691, 1.0
      %v708 = vrcp.pop %v692
      %v709 = vmul.f32 1.0, %v708
      %v710 = vrcp.pop %v693
      %v711 = vmul.f32 1.0, %v710
      %v712 = vrcp.pop %v694
      %v713 = vmul.f32 1.0, %v712
      %v714 = vrcp.pop %v695
      %v715 = vmul.f32 1.0, %v714
      %v716 = vrcp.pop %v696
      %v717 = vmul.f32 1.0, %v716
      %v718 = vrcp.pop %v697
      %v719 = vmul.f32 1.0, %v718
      %v720 = vrcp.pop %v698
      %v721 = vmul.f32 1.0, %v720
      %v722 = vrcp.pop %v699
      %v723 = vmul.f32 1.0, %v722
      %v724 = vrcp.pop %v700
      %v725 = vmul.f32 1.0, %v724
      %v726 = vrcp.pop %v701
      %v727 = vmul.f32 1.0, %v726
      %v728 = vrcp.pop %v702
      %v729 = vmul.f32 1.0, %v728
      %v730 = vrcp.pop %v703
      %v731 = vmul.f32 1.0, %v730
      %v732 = vrcp.pop %v704
      %v733 = vmul.f32 1.0, %v732
      %v734 = vrcp.pop %v705
      %v735 = vmul.f32 1.0, %v734
      %v736 = vrcp.pop %v706
      %v737 = vmul.f32 1.0, %v736
      %v738 = vrcp.pop %v707
      %v739 = vmul.f32 1.0, %v738
      %740 = vst.msk [vmem:[%s172] sm:$0xff] %vm261, %v709
      %741 = vst.msk [vmem:[%s172 + $0x8] sm:$0xff] %vm261, %v711
      %742 = vst.msk [vmem:[%s172 + $0x10] sm:$0xff] %vm261, %v713
      %743 = vst.msk [vmem:[%s172 + $0x18] sm:$0xff] %vm261, %v715
      %744 = vst.msk [vmem:[%s172 + $0x20] sm:$0xff] %vm261, %v717
      %745 = vst.msk [vmem:[%s172 + $0x28] sm:$0xff] %vm261, %v719
      %746 = vst.msk [vmem:[%s172 + $0x30] sm:$0xff] %vm261, %v721
      %747 = vst.msk [vmem:[%s172 + $0x38] sm:$0xff] %vm261, %v723
      %748 = vst.msk [vmem:[%s172 + $0x40] sm:$0xff] %vm261, %v725
      %749 = vst.msk [vmem:[%s172 + $0x48] sm:$0xff] %vm261, %v727
      %750 = vst.msk [vmem:[%s172 + $0x50] sm:$0xff] %vm261, %v729
      %751 = vst.msk [vmem:[%s172 + $0x58] sm:$0xff] %vm261, %v731
      %752 = vst.msk [vmem:[%s172 + $0x60] sm:$0xff] %vm261, %v733
      %753 = vst.msk [vmem:[%s172 + $0x68] sm:$0xff] %vm261, %v735
      %754 = vst.msk [vmem:[%s172 + $0x70] sm:$0xff] %vm261, %v737
      %755 = vst.msk [vmem:[%s172 + $0x78] sm:$0xff] %vm261, %v739
      %s756 = smul.u32 16, %s14
      %p757 = scmp.lt.s32.totalorder %s756, 31
      %s758 = scalar_select %p757, %s756, 31
      %s759 = smul.addr %s758, 8
      %s760 = scalar_lea.vmem %s3, %s759
      // Predicated region
      $region33: #{tpu_custom_call.1} parent=31 // pred_check
        %p761 = pneg %p100
      $region34: #{tpu_custom_call.1} parent=31 // pred_check_branch
        %763 = sbr.rel (%p761) target = $region36
      $region35: #{tpu_custom_call.1} parent=31 // pred_region
        %s764 = smul.u32 16, %s14
      $region36: #{tpu_custom_call.1} parent=31 // pred_fallthru
        _
    $region32: #{tpu_custom_call.1} parent=5 // pred_fallthru
      _
    %p765 = scmp.le.s32.totalorder 2, %s9
    // Predicated region
    $region37: #{tpu_custom_call.1} parent=5 // pred_check
      %p766 = pneg %p765
    $region38: #{tpu_custom_call.1} parent=5 // pred_check_branch
      %768 = sbr.rel (%p766) target = $region40
    $region39: #{tpu_custom_call.1} parent=5 // pred_region
      %s769 = ssub.s32 %s9, 2
      // Predicated region
      $region41: #{tpu_custom_call.1} parent=39 // pred_check
        %p770 = pneg %p106
      $region42: #{tpu_custom_call.1} parent=39 // pred_check_branch
        %772 = sbr.rel (%p770) target = $region44
      $region43: #{tpu_custom_call.1} parent=39 // pred_region
        %s773 = smul.u32 16, %s15
        %p774 = scmp.lt.s32.totalorder %s773, 31
        %s775 = scalar_select %p774, %s773, 31
        %s776 = smul.addr %s775, 8
        %s777 = scalar_lea.vmem %s3, %s776
      $region44: #{tpu_custom_call.1} parent=39 // pred_fallthru
        _
    $region40: #{tpu_custom_call.1} parent=5 // pred_fallthru
      _
  $region6: #{tpu_custom_call.1} parent=0 // loop_footer
    %s13 = sadd.s32 1, %s9
  $region7: #{tpu_custom_call.1} parent=0 // loop_footer_branch
    %8 = sbr.rel target = $region3
  $region8: #{tpu_custom_call.1} parent=0 // loop_exit
    _

</llo_original>
